<compile_context>
chip_gen: v5e
topology: v5e:2x2
jax: 0.10.0
libtpu: 0.0.40
codegen_flags: <defaults>
</compile_context>

<pallas_src>
import functools

import jax
import jax.numpy as jnp
from jax.experimental import pallas as pl
from jax.experimental.pallas import tpu as pltpu

_LANES = 128
_NUM_CORES = 2               # outer "parallel" axis: 2x on v7x, no-op elsewhere
_TEMP_BYTES_PER_ELEM = 20    # ~5 live (TB, C) f32/i32 temporaries in the body
_NARROW_STREAMS = 4          # target / cso / logq_at_t / t1_row (lane-padded to 128)


def _ls_ce_ib_kernel(x_ref, target_ref, cso_ref, logq_at_t_ref, t1_ref,
                     loss_ref, ib_ref, *, smoothing: float, batch_total: int,
                     tile_b: int, tiles_per_core: int):
    confidence = 1.0 - smoothing
    core = pl.program_id(0)
    step = pl.program_id(1)

    @pl.when(step == 0)
    def _init():
        loss_ref[...] = jnp.zeros_like(loss_ref)
        ib_ref[...] = jnp.zeros_like(ib_ref)

    x = x_ref[...].astype(jnp.float32)          # (TB, C)
    target = target_ref[...]                    # (TB, 1) int32
    cso = cso_ref[...].astype(jnp.float32)      # (TB, K_out)
    logq_at_t = logq_at_t_ref[...]              # (TB, K_out) f32 = log(Q)[:, target].T
    t1_row = t1_ref[...]                        # (TB, 1) f32

    tb, C = x.shape
    inv_b = 1.0 / batch_total
    inv_c = 1.0 / C

    # Intended (unclamped) tile index; phantom / padded rows are masked below.
    tile_idx = core * tiles_per_core + step
    row_idx = tile_idx * tile_b + jax.lax.broadcasted_iota(jnp.int32, (tb, 1), 0)
    valid = row_idx < batch_total               # (TB, 1)

    # ---- label-smoothed CE: no logprobs materialized, single weighted reduction
    #   loss_row = logsumexp(x) - sum_c x * w,  w = smoothing/C + confidence*onehot
    m = jnp.max(x, axis=-1, keepdims=True)                              # (TB,1)
    lse = jnp.log(jnp.sum(jnp.exp(x - m), axis=-1, keepdims=True))      # (TB,1)
    cls_iota = jax.lax.broadcasted_iota(jnp.int32, (tb, C), 1)
    onehot_mask = cls_iota == target                                    # bool (TB,C)
    w = jnp.where(onehot_mask, confidence + smoothing * inv_c, smoothing * inv_c)
    loss_row = (m + lse) - jnp.sum(x * w, axis=-1, keepdims=True)       # (TB,1)

    # ---- IB loss: bound = term_1 - term_2 (term_1 factor precomputed in wrapper)
    term_2 = jnp.sum(cso * logq_at_t, axis=-1, keepdims=True)           # (TB,1)
    bound_row = t1_row - term_2

    # Masked (select, NOT multiplicative) partial sums scaled by 1/B so the
    # accumulators hold running means; padded rows never leak NaN/Inf.
    loss_part = jnp.sum(jnp.where(valid, loss_row, 0.0)) * inv_b
    bound_part = jnp.sum(jnp.where(valid, bound_row, 0.0)) * inv_b

    loss_ref[...] += jnp.broadcast_to(loss_part, (1, _LANES))
    ib_ref[...] += jnp.broadcast_to(bound_part, (1, _LANES))


def _round_up(a: int, m: int) -> int:
    return ((a + m - 1) // m) * m


def _vmem_budget_and_limit():
    # Conservative defaults sized for v7x (64 MiB physical VMEM per TensorCore).
    budget, limit = 20 << 20, 48 << 20
    try:
        cap = int(pltpu.get_tpu_info().vmem_capacity_bytes)
        if cap >= (96 << 20):           # v5e / v6e: 128 MiB physical VMEM
            budget, limit = 64 << 20, 96 << 20
    except Exception:
        pass
    return budget, limit


def _pick_batch_tile(B: int, C: int, x_itemsize: int, budget_bytes: int) -> int:
    # Per-row VMEM: double-buffered x block + ~5 live (TB,C) f32/i32 temporaries
    # (x cast, iota, mask->weight, exp(x-m), x*w) + 4 narrow streams lane-padded
    # to 128 lanes, each double-buffered.
    per_row = C * (2 * x_itemsize + _TEMP_BYTES_PER_ELEM) + _NARROW_STREAMS * _LANES * 4 * 2
    max_rows = max(8, budget_bytes // per_row)
    per_core = _round_up(pl.cdiv(B, _NUM_CORES), 32)   # let both v7x cores get work
    tb = min(B, max_rows, 2048, per_core)
    if tb >= B:
        return B                         # full-dim block is always legal
    if tb >= 32:
        return (tb // 32) * 32           # sublane-aligned for any input dtype
    return max(8, (tb // 8) * 8)


def label_smoothing_ce_ib(x, target, clust_score_input, clust_score_output, Q,
                          smoothing: float = 0.1, _tile_override=None):
    """Returns (loss_mean, IB_loss) as float32 scalars."""
    assert smoothing < 1.0
    B, C = x.shape
    k_out = clust_score_output.shape[1]

    target_i32 = target.astype(jnp.int32)
    target2d = target_i32.reshape(B, 1)

    # Hoisted tiny per-row IB factors (O(B*K) wrapper-side work): removes the csi
    # stream, an EUP log pass, two small reductions, the (TB, class_num) one-hot
    # matmul and the lane-padded resident log(Q).T buffer from the kernel.
    csi = clust_score_input.astype(jnp.float32)
    cso_f32 = clust_score_output.astype(jnp.float32)
    # TODO(synk): jnp.log(csi)/log(Q) inherit the reference's -inf/NaN hazard for
    # zero probabilities (0*log(0) -> NaN), matching the PyTorch module.
    t1_row = (jnp.sum(cso_f32, axis=-1) *
              jnp.sum(csi * jnp.log(csi), axis=-1)).reshape(B, 1)
    logq_at_t = jnp.log(Q.astype(jnp.float32)).T[target_i32]          # (B, K_out)

    budget, vmem_limit = _vmem_budget_and_limit()
    tb = int(_tile_override) if _tile_override else _pick_batch_tile(
        B, C, jnp.dtype(x.dtype).itemsize, budget)
    nt = pl.cdiv(B, tb)
    tiles_per_core = pl.cdiv(nt, _NUM_CORES)
    grid = (_NUM_CORES, tiles_per_core)

    def tile_map(c, i):
        # Clamp phantom tiles back in range; their rows are masked in-kernel.
        return (jnp.minimum(c * tiles_per_core + i, nt - 1), 0)

    kernel = functools.partial(_ls_ce_ib_kernel, smoothing=float(smoothing),
                               batch_total=B, tile_b=tb,
                               tiles_per_core=tiles_per_core)

    loss_acc, ib_acc = pl.pallas_call(
        kernel,
        out_shape=(jax.ShapeDtypeStruct((1, _NUM_CORES * _LANES), jnp.float32),
                   jax.ShapeDtypeStruct((1, _NUM_CORES * _LANES), jnp.float32)),
        grid_spec=pltpu.PrefetchScalarGridSpec(
            num_scalar_prefetch=0,
            grid=grid,
            in_specs=[
                pl.BlockSpec((tb, C), tile_map),         # x (dominant stream)
                pl.BlockSpec((tb, 1), tile_map),         # target
                pl.BlockSpec((tb, k_out), tile_map),     # clust_score_output
                pl.BlockSpec((tb, k_out), tile_map),     # log(Q)[:, target].T
                pl.BlockSpec((tb, 1), tile_map),         # term_1 row factor
            ],
            out_specs=(
                pl.BlockSpec((1, _LANES), lambda c, i: (0, c)),   # per-core loss acc
                pl.BlockSpec((1, _LANES), lambda c, i: (0, c)),   # per-core IB acc
            ),
        ),
        compiler_params=pltpu.CompilerParams(
            dimension_semantics=("parallel", "arbitrary"),
            vmem_limit_bytes=vmem_limit),
    )(x, target2d, clust_score_output, logq_at_t, t1_row)

    loss = jnp.sum(loss_acc.reshape(_NUM_CORES, _LANES)[:, 0])
    ib = jnp.sum(ib_acc.reshape(_NUM_CORES, _LANES)[:, 0])
    return loss, ib


def _reference(x, target, csi, cso, Q, smoothing=0.1):
    confidence = 1.0 - smoothing
    logprobs = jax.nn.log_softmax(x.astype(jnp.float32), axis=-1)
    nll = -jnp.take_along_axis(logprobs, target[:, None], axis=-1)[:, 0]
    smooth = -jnp.mean(logprobs, axis=-1)
    loss = (confidence * nll + smoothing * smooth).mean()
    class_num = Q.shape[1]
    one_hot = jax.nn.one_hot(target, class_num, dtype=jnp.float32)
    term1 = jnp.sum(cso[:, :, None] * csi[:, None, :] * jnp.log(csi)[:, None, :],
                    axis=(-2, -1))
    term2 = jnp.sum(cso[:, :, None] * one_hot[:, None, :] * jnp.log(Q)[None, :, :],
                    axis=(-2, -1))
    return loss, (term1 - term2).mean()


def _run_case(key, B, C, K, smoothing, tile_override=None):
    kx, kt, ki, ko, kq = jax.random.split(key, 5)
    x = jax.random.normal(kx, (B, C), dtype=jnp.float32)
    target = jax.random.randint(kt, (B,), 0, C, dtype=jnp.int32)
    csi = jax.nn.softmax(jax.random.normal(ki, (B, K)), axis=-1)
    cso = jax.nn.softmax(jax.random.normal(ko, (B, K)), axis=-1)
    Q = jax.nn.softmax(jax.random.normal(kq, (K, C)), axis=-1)

    loss, ib = label_smoothing_ce_ib(x, target, csi, cso, Q, smoothing=smoothing,
                                     _tile_override=tile_override)
    jax.block_until_ready((loss, ib))
    ref_loss, ref_ib = _reference(x, target, csi, cso, Q, smoothing=smoothing)
    assert jnp.allclose(loss, ref_loss, rtol=1e-5, atol=1e-5), (loss, ref_loss)
    assert jnp.allclose(ib, ref_ib, rtol=1e-5, atol=1e-5), (ib, ref_ib)


if __name__ == "__main__":
    key = jax.random.PRNGKey(0)
    k1, k2 = jax.random.split(key)
    # Small single-tile case.
    _run_case(k1, B=8, C=32, K=4, smoothing=0.1)
    # Multi-tile case exercising the dual-core split, partial tail tile and
    # phantom-tile clamping (B=40 with forced tile of 16 rows).
    _run_case(k2, B=40, C=32, K=4, smoothing=0.1, tile_override=16)
    print("KERNEL_OK")
</pallas_src>

<mosaic_0001>
module attributes {stable_mosaic.version = 11 : i64} {
  func.func @_ls_ce_ib_kernel(%arg0: i32, %arg1: i32, %arg2: memref<8x32xf32, #tpu.memory_space<vmem>>, %arg3: memref<8x1xi32, #tpu.memory_space<vmem>>, %arg4: memref<8x4xf32, #tpu.memory_space<vmem>>, %arg5: memref<8x4xf32, #tpu.memory_space<vmem>>, %arg6: memref<8x1xf32, #tpu.memory_space<vmem>>, %arg7: memref<1x128xf32, #tpu.memory_space<vmem>>, %arg8: memref<1x128xf32, #tpu.memory_space<vmem>>) attributes {dimension_semantics = [#tpu.dimension_semantics<parallel>, #tpu.dimension_semantics<arbitrary>], iteration_bounds = array<i64: 2, 1>, scalar_prefetch = 0 : i64, scratch_operands = 0 : i64, tpu.core_type = #tpu.core_type<tc>, window_params = [{transform_indices = @transform_0, window_bounds = array<i64: 8, 32>}, {transform_indices = @transform_1, window_bounds = array<i64: 8, 1>}, {transform_indices = @transform_2, window_bounds = array<i64: 8, 4>}, {transform_indices = @transform_3, window_bounds = array<i64: 8, 4>}, {transform_indices = @transform_4, window_bounds = array<i64: 8, 1>}, {transform_indices = @transform_5, window_bounds = array<i64: 1, 128>}, {transform_indices = @transform_6, window_bounds = array<i64: 1, 128>}]} {
    %c0_i32 = arith.constant 0 : i32
    %0 = arith.cmpi eq, %arg1, %c0_i32 : i32
    %1 = arith.extui %0 : i1 to i32
    %c0_i32_0 = arith.constant 0 : i32
    %2 = arith.cmpi ne, %1, %c0_i32_0 : i32
    scf.if %2 {
      %cst_30 = arith.constant 0.000000e+00 : f32
      %61 = vector.broadcast %cst_30 : f32 to vector<1x128xf32>
      %c0_31 = arith.constant 0 : index
      %c0_32 = arith.constant 0 : index
      %62 = vector.load %arg7[%c0_31, %c0_32] : memref<1x128xf32, #tpu.memory_space<vmem>>, vector<1x128xf32>
      tpu.vector_store %arg7[%c0_31, %c0_32], %61 {strides = array<i32>} : memref<1x128xf32, #tpu.memory_space<vmem>>, vector<1x128xf32>,
      %cst_33 = arith.constant 0.000000e+00 : f32
      %63 = vector.broadcast %cst_33 : f32 to vector<1x128xf32>
      %c0_34 = arith.constant 0 : index
      %c0_35 = arith.constant 0 : index
      %64 = vector.load %arg8[%c0_34, %c0_35] : memref<1x128xf32, #tpu.memory_space<vmem>>, vector<1x128xf32>
      tpu.vector_store %arg8[%c0_34, %c0_35], %63 {strides = array<i32>} : memref<1x128xf32, #tpu.memory_space<vmem>>, vector<1x128xf32>,
    } else {
    }
    %c0 = arith.constant 0 : index
    %c0_1 = arith.constant 0 : index
    %3 = vector.load %arg2[%c0, %c0_1] : memref<8x32xf32, #tpu.memory_space<vmem>>, vector<8x32xf32>
    %c0_2 = arith.constant 0 : index
    %c0_3 = arith.constant 0 : index
    %4 = vector.load %arg3[%c0_2, %c0_3] : memref<8x1xi32, #tpu.memory_space<vmem>>, vector<8x1xi32>
    %c0_4 = arith.constant 0 : index
    %c0_5 = arith.constant 0 : index
    %5 = vector.load %arg4[%c0_4, %c0_5] : memref<8x4xf32, #tpu.memory_space<vmem>>, vector<8x4xf32>
    %c0_6 = arith.constant 0 : index
    %c0_7 = arith.constant 0 : index
    %6 = vector.load %arg5[%c0_6, %c0_7] : memref<8x4xf32, #tpu.memory_space<vmem>>, vector<8x4xf32>
    %c0_8 = arith.constant 0 : index
    %c0_9 = arith.constant 0 : index
    %7 = vector.load %arg6[%c0_8, %c0_9] : memref<8x1xf32, #tpu.memory_space<vmem>>, vector<8x1xf32>
    %c1_i32 = arith.constant 1 : i32
    %8 = arith.muli %arg0, %c1_i32 : i32
    %9 = arith.addi %8, %arg1 : i32
    %c8_i32 = arith.constant 8 : i32
    %10 = arith.muli %9, %c8_i32 : i32
    %11 = tpu.iota {dimensions = array<i32: 0>} : vector<8x1xi32>
    %12 = vector.broadcast %10 : i32 to vector<8x1xi32>
    %13 = arith.addi %12, %11 : vector<8x1xi32>
    %c8_i32_10 = arith.constant 8 : i32
    %14 = vector.broadcast %c8_i32_10 : i32 to vector<8x1xi32>
    %15 = arith.cmpi slt, %13, %14 : vector<8x1xi32>
    %cst = arith.constant dense<0xFF800000> : vector<8xf32>
    %16 = vector.multi_reduction <maximumf>, %3, %cst [1] : vector<8x32xf32> to vector<8xf32>
    %17 = vector.shape_cast %16 : vector<8xf32> to vector<8x1xf32>
    %18 = vector.broadcast %17 : vector<8x1xf32> to vector<8x32xf32>
    %19 = arith.subf %3, %18 : vector<8x32xf32>
    %20 = math.exp %19 : vector<8x32xf32>
    %cst_11 = arith.constant dense<0.000000e+00> : vector<8xf32>
    %21 = vector.multi_reduction <add>, %20, %cst_11 [1] : vector<8x32xf32> to vector<8xf32>
    %22 = vector.shape_cast %21 : vector<8xf32> to vector<8x1xf32>
    %23 = math.log %22 : vector<8x1xf32>
    %24 = tpu.iota {dimensions = array<i32: 1>} : vector<8x32xi32>
    %25 = vector.broadcast %4 : vector<8x1xi32> to vector<8x32xi32>
    %26 = arith.cmpi eq, %24, %25 : vector<8x32xi32>
    %cst_12 = arith.constant 0.903124988 : f32
    %cst_13 = arith.constant 3.125000e-03 : f32
    %27 = vector.broadcast %cst_12 : f32 to vector<8x32xf32>
    %28 = vector.broadcast %cst_13 : f32 to vector<8x32xf32>
    %29 = arith.select %26, %27, %28 : vector<8x32xi1>, vector<8x32xf32>
    %30 = arith.addf %17, %23 : vector<8x1xf32>
    %31 = arith.mulf %3, %29 : vector<8x32xf32>
    %cst_14 = arith.constant dense<0.000000e+00> : vector<8xf32>
    %32 = vector.multi_reduction <add>, %31, %cst_14 [1] : vector<8x32xf32> to vector<8xf32>
    %33 = vector.shape_cast %32 : vector<8xf32> to vector<8x1xf32>
    %34 = arith.subf %30, %33 : vector<8x1xf32>
    %35 = arith.mulf %5, %6 : vector<8x4xf32>
    %cst_15 = arith.constant dense<0.000000e+00> : vector<8xf32>
    %36 = vector.multi_reduction <add>, %35, %cst_15 [1] : vector<8x4xf32> to vector<8xf32>
    %37 = vector.shape_cast %36 : vector<8xf32> to vector<8x1xf32>
    %38 = arith.subf %7, %37 : vector<8x1xf32>
    %cst_16 = arith.constant 0.000000e+00 : f32
    %39 = vector.broadcast %cst_16 : f32 to vector<8x1xf32>
    %40 = arith.select %15, %34, %39 : vector<8x1xi1>, vector<8x1xf32>
    %41 = vector.shape_cast %40 : vector<8x1xf32> to vector<1x8x1xf32>
    %cst_17 = arith.constant dense<0.000000e+00> : vector<1xf32>
    %42 = vector.multi_reduction <add>, %41, %cst_17 [1, 2] : vector<1x8x1xf32> to vector<1xf32>
    %43 = vector.shape_cast %42 : vector<1xf32> to vector<1x1x1xf32>
    %44 = vector.extract %43[0, 0, 0] : f32 from vector<1x1x1xf32>
    %cst_18 = arith.constant 1.250000e-01 : f32
    %45 = arith.mulf %44, %cst_18 : f32
    %cst_19 = arith.constant 0.000000e+00 : f32
    %46 = vector.broadcast %cst_19 : f32 to vector<8x1xf32>
    %47 = arith.select %15, %38, %46 : vector<8x1xi1>, vector<8x1xf32>
    %48 = vector.shape_cast %47 : vector<8x1xf32> to vector<1x8x1xf32>
    %cst_20 = arith.constant dense<0.000000e+00> : vector<1xf32>
    %49 = vector.multi_reduction <add>, %48, %cst_20 [1, 2] : vector<1x8x1xf32> to vector<1xf32>
    %50 = vector.shape_cast %49 : vector<1xf32> to vector<1x1x1xf32>
    %51 = vector.extract %50[0, 0, 0] : f32 from vector<1x1x1xf32>
    %cst_21 = arith.constant 1.250000e-01 : f32
    %52 = arith.mulf %51, %cst_21 : f32
    %c0_22 = arith.constant 0 : index
    %c0_23 = arith.constant 0 : index
    %53 = vector.load %arg7[%c0_22, %c0_23] : memref<1x128xf32, #tpu.memory_space<vmem>>, vector<1x128xf32>
    %54 = vector.broadcast %45 : f32 to vector<1x128xf32>
    %55 = arith.addf %53, %54 : vector<1x128xf32>
    %c0_24 = arith.constant 0 : index
    %c0_25 = arith.constant 0 : index
    %56 = vector.load %arg7[%c0_24, %c0_25] : memref<1x128xf32, #tpu.memory_space<vmem>>, vector<1x128xf32>
    tpu.vector_store %arg7[%c0_24, %c0_25], %55 {strides = array<i32>} : memref<1x128xf32, #tpu.memory_space<vmem>>, vector<1x128xf32>,
    %c0_26 = arith.constant 0 : index
    %c0_27 = arith.constant 0 : index
    %57 = vector.load %arg8[%c0_26, %c0_27] : memref<1x128xf32, #tpu.memory_space<vmem>>, vector<1x128xf32>
    %58 = vector.broadcast %52 : f32 to vector<1x128xf32>
    %59 = arith.addf %57, %58 : vector<1x128xf32>
    %c0_28 = arith.constant 0 : index
    %c0_29 = arith.constant 0 : index
    %60 = vector.load %arg8[%c0_28, %c0_29] : memref<1x128xf32, #tpu.memory_space<vmem>>, vector<1x128xf32>
    tpu.vector_store %arg8[%c0_28, %c0_29], %59 {strides = array<i32>} : memref<1x128xf32, #tpu.memory_space<vmem>>, vector<1x128xf32>,
    return
  }
  func.func @transform_0(%arg0: i32, %arg1: i32) -> (i32, i32) {
    %c1_i32 = arith.constant 1 : i32
    %0 = arith.muli %arg0, %c1_i32 : i32
    %1 = arith.addi %0, %arg1 : i32
    %c0_i32 = arith.constant 0 : i32
    %2 = arith.minsi %1, %c0_i32 : i32
    %c0_i32_0 = arith.constant 0 : i32
    %c0_i32_1 = arith.constant 0 : i32
    return %2, %c0_i32_0 : i32, i32
  }
  func.func @transform_1(%arg0: i32, %arg1: i32) -> (i32, i32) {
    %c1_i32 = arith.constant 1 : i32
    %0 = arith.muli %arg0, %c1_i32 : i32
    %1 = arith.addi %0, %arg1 : i32
    %c0_i32 = arith.constant 0 : i32
    %2 = arith.minsi %1, %c0_i32 : i32
    %c0_i32_0 = arith.constant 0 : i32
    %c0_i32_1 = arith.constant 0 : i32
    return %2, %c0_i32_0 : i32, i32
  }
  func.func @transform_2(%arg0: i32, %arg1: i32) -> (i32, i32) {
    %c1_i32 = arith.constant 1 : i32
    %0 = arith.muli %arg0, %c1_i32 : i32
    %1 = arith.addi %0, %arg1 : i32
    %c0_i32 = arith.constant 0 : i32
    %2 = arith.minsi %1, %c0_i32 : i32
    %c0_i32_0 = arith.constant 0 : i32
    %c0_i32_1 = arith.constant 0 : i32
    return %2, %c0_i32_0 : i32, i32
  }
  func.func @transform_3(%arg0: i32, %arg1: i32) -> (i32, i32) {
    %c1_i32 = arith.constant 1 : i32
    %0 = arith.muli %arg0, %c1_i32 : i32
    %1 = arith.addi %0, %arg1 : i32
    %c0_i32 = arith.constant 0 : i32
    %2 = arith.minsi %1, %c0_i32 : i32
    %c0_i32_0 = arith.constant 0 : i32
    %c0_i32_1 = arith.constant 0 : i32
    return %2, %c0_i32_0 : i32, i32
  }
  func.func @transform_4(%arg0: i32, %arg1: i32) -> (i32, i32) {
    %c1_i32 = arith.constant 1 : i32
    %0 = arith.muli %arg0, %c1_i32 : i32
    %1 = arith.addi %0, %arg1 : i32
    %c0_i32 = arith.constant 0 : i32
    %2 = arith.minsi %1, %c0_i32 : i32
    %c0_i32_0 = arith.constant 0 : i32
    %c0_i32_1 = arith.constant 0 : i32
    return %2, %c0_i32_0 : i32, i32
  }
  func.func @transform_5(%arg0: i32, %arg1: i32) -> (i32, i32) {
    %c0_i32 = arith.constant 0 : i32
    %c0_i32_0 = arith.constant 0 : i32
    return %c0_i32, %arg0 : i32, i32
  }
  func.func @transform_6(%arg0: i32, %arg1: i32) -> (i32, i32) {
    %c0_i32 = arith.constant 0 : i32
    %c0_i32_0 = arith.constant 0 : i32
    return %c0_i32, %arg0 : i32, i32
  }
}

</mosaic_0001>

<llo_original>
// kernel: tpu_custom_call.1
$region0: #{tpu_custom_call.1}
  #allocation0 [shape = 'u32[]', space=smem, size = 0x4, offset = 0x4, fixed_abs, tag = 'smem constant byte address 0x4 - core index']
  #allocation1 [shape = 'u32[72,128]{1,0:T(1,128)}', space=vmem, size = 0x9000, scoped, tag = 'internal scratch']
  %s0 = inlined_call_operand.vmem [shape: f32[8,32], index: 0, kind: input, shape index: {}]
  %s1 = inlined_call_operand.vmem [shape: s32[8,1], index: 1, kind: input, shape index: {}]
  %s2 = inlined_call_operand.vmem [shape: f32[8,4], index: 2, kind: input, shape index: {}]
  %s3 = inlined_call_operand.vmem [shape: f32[8,4], index: 3, kind: input, shape index: {}]
  %s4 = inlined_call_operand.vmem [shape: f32[8,1], index: 4, kind: input, shape index: {}]
  %s5 = inlined_call_operand.hbm [shape: f32[1,256], index: 5, kind: output, shape index: {0}]
  %s6 = inlined_call_operand.hbm [shape: f32[1,256], index: 6, kind: output, shape index: {1}]
  %7 = xla_tuple %s5, %s6
  %s8 = sld [smem:[#allocation0]]
  $region65: #{tpu_custom_call.1} parent=0
    _
  %s10 = ssub.s32 1, %s8
  %s11 = scalar_select 0, %s10, %s8
  $region1: #{tpu_custom_call.1} parent=0
    #allocation2 [shape = 'u8[1024]{0}', space=vmem, size = 0x400, scoped, tag = 'output window, operand 0']
    #allocation3 [shape = 's32[2]{0}', space=sflag, size = 0x8, scoped, tag = 'scoped memory for tpu_custom_call.1']
    #allocation4 [shape = 'u8[1024]{0}', space=vmem, size = 0x400, scoped, tag = 'output window, operand 1']
    #allocation5 [shape = 's32[2]{0}', space=sflag, size = 0x8, scoped, tag = 'scoped memory for tpu_custom_call.1']
    %12 = vsyncpa [#allocation3], 0
    %s13 = scalar_lea.sflag [#allocation3], 1
    %14 = vsyncpa %s13, 0
    %15 = vsyncpa [#allocation5], 0
    %s16 = scalar_lea.sflag [#allocation5], 1
    %17 = vsyncpa %s16, 0
    loop: start=0, step=1, limit=4
    $region2: #{tpu_custom_call.1} parent=1 // loop_pre_header
      _
    $region3: #{tpu_custom_call.1} parent=1 // loop_header
      %s19 = sphi 0, %s23
      %p20 = scmp.ge.s32.totalorder %s19, 4
      %s26 = sphi 0, %s38
      %s27 = sphi 0, %s34
      %s28 = sphi 0, %s26
      %s29 = sphi 0, %s27
      %s30 = sphi 0, %s28
      %s31 = sphi 0, %s29
      %s47 = sphi 0, %s49
      %s50 = sphi 0, %s47
      %s51 = sphi 0, %s50
      %s67 = sphi 0, %s51
      %s79 = sphi 0, %s81
      %s82 = sphi 0, %s79
      %s83 = sphi 0, %s82
      %s99 = sphi 0, %s83
      %s111 = sphi 0, %s113
      %s114 = sphi 0, %s111
      %s115 = sphi 0, %s114
      %s131 = sphi 0, %s115
      %s143 = sphi 0, %s145
      %s146 = sphi 0, %s143
      %s147 = sphi 0, %s146
      %s163 = sphi 0, %s147
      %s175 = sphi 0, %s177
      %s178 = sphi 0, %s175
      %s179 = sphi 0, %s178
      %s195 = sphi 0, %s179
      %s201 = sphi 0, %s203
      %s204 = sphi 0, %s201
      %s205 = sphi 0, %s204
      %s221 = sphi 0, %s205
      %s227 = sphi 0, %s229
      %s230 = sphi 0, %s227
      %s231 = sphi 0, %s230
      %s247 = sphi 0, %s231
    $region4: #{tpu_custom_call.1} parent=1 // loop_header_branch
      %22 = sbr.rel (%p20) target = $region8
    $region5: #{tpu_custom_call.1} parent=1 // loop_body
      %s24 = ssub.s32 %s19, 1
      %s25 = ssub.s32 %s19, 2
      %s32 = sadd.s32 1, %s27
      %p33 = scmp.ge.s32.totalorder %s32, 1
      %s34 = scalar_select %p33, 0, %s32
      %s35 = sadd.s32 1, %s26
      %s36 = scalar_select %p33, %s35, %s26
      %p37 = scmp.ge.s32.totalorder %s36, 2
      %s38 = scalar_select %p37, 0, %s36
      %s39 = sadd.s32 %s26, %s27
      %p40 = scmp.lt.s32.totalorder %s39, 0
      %s41 = scalar_select %p40, %s39, 0
      %s42 = sadd.s32 %s38, %s34
      %p43 = scmp.lt.s32.totalorder %s42, 0
      %s44 = scalar_select %p43, %s42, 0
      %s45 = ssub.s32 %s41, %s44
      %p46 = scmp.eq.s32.totalorder %s45, 0
      %s48 = sadd.s32 %s47, 1
      %s49 = scalar_select %p46, %s47, %s48
      %p52 = pneg %p46
      %p53 = scmp.eq.s32.totalorder %s19, 1
      %p54 = por %p52, %p53
      %p55 = scmp.ne.s32.totalorder %s47, %s50
      %p56 = scmp.eq.s32.totalorder %s19, 0
      %p57 = por %p55, %p56
      %p58 = scmp.ne.s32.totalorder %s47, %s50
      %p59 = scmp.eq.s32.totalorder %s24, 1
      %p60 = por %p58, %p59
      %p61 = scmp.ne.s32.totalorder %s50, %s51
      %p62 = scmp.eq.s32.totalorder %s24, 0
      %p63 = por %p61, %p62
      %p64 = scmp.ne.s32.totalorder %s50, %s51
      %p65 = scmp.eq.s32.totalorder %s25, 1
      %p66 = por %p64, %p65
      %p68 = scmp.ne.s32.totalorder %s51, %s67
      %p69 = scmp.eq.s32.totalorder %s25, 0
      %p70 = por %p68, %p69
      %s71 = sadd.s32 %s26, %s27
      %p72 = scmp.lt.s32.totalorder %s71, 0
      %s73 = scalar_select %p72, %s71, 0
      %s74 = sadd.s32 %s38, %s34
      %p75 = scmp.lt.s32.totalorder %s74, 0
      %s76 = scalar_select %p75, %s74, 0
      %s77 = ssub.s32 %s73, %s76
      %p78 = scmp.eq.s32.totalorder %s77, 0
      %s80 = sadd.s32 %s79, 1
      %s81 = scalar_select %p78, %s79, %s80
      %p84 = pneg %p78
      %p85 = scmp.eq.s32.totalorder %s19, 1
      %p86 = por %p84, %p85
      %p87 = scmp.ne.s32.totalorder %s79, %s82
      %p88 = scmp.eq.s32.totalorder %s19, 0
      %p89 = por %p87, %p88
      %p90 = scmp.ne.s32.totalorder %s79, %s82
      %p91 = scmp.eq.s32.totalorder %s24, 1
      %p92 = por %p90, %p91
      %p93 = scmp.ne.s32.totalorder %s82, %s83
      %p94 = scmp.eq.s32.totalorder %s24, 0
      %p95 = por %p93, %p94
      %p96 = scmp.ne.s32.totalorder %s82, %s83
      %p97 = scmp.eq.s32.totalorder %s25, 1
      %p98 = por %p96, %p97
      %p100 = scmp.ne.s32.totalorder %s83, %s99
      %p101 = scmp.eq.s32.totalorder %s25, 0
      %p102 = por %p100, %p101
      %s103 = sadd.s32 %s26, %s27
      %p104 = scmp.lt.s32.totalorder %s103, 0
      %s105 = scalar_select %p104, %s103, 0
      %s106 = sadd.s32 %s38, %s34
      %p107 = scmp.lt.s32.totalorder %s106, 0
      %s108 = scalar_select %p107, %s106, 0
      %s109 = ssub.s32 %s105, %s108
      %p110 = scmp.eq.s32.totalorder %s109, 0
      %s112 = sadd.s32 %s111, 1
      %s113 = scalar_select %p110, %s111, %s112
      %p116 = pneg %p110
      %p117 = scmp.eq.s32.totalorder %s19, 1
      %p118 = por %p116, %p117
      %p119 = scmp.ne.s32.totalorder %s111, %s114
      %p120 = scmp.eq.s32.totalorder %s19, 0
      %p121 = por %p119, %p120
      %p122 = scmp.ne.s32.totalorder %s111, %s114
      %p123 = scmp.eq.s32.totalorder %s24, 1
      %p124 = por %p122, %p123
      %p125 = scmp.ne.s32.totalorder %s114, %s115
      %p126 = scmp.eq.s32.totalorder %s24, 0
      %p127 = por %p125, %p126
      %p128 = scmp.ne.s32.totalorder %s114, %s115
      %p129 = scmp.eq.s32.totalorder %s25, 1
      %p130 = por %p128, %p129
      %p132 = scmp.ne.s32.totalorder %s115, %s131
      %p133 = scmp.eq.s32.totalorder %s25, 0
      %p134 = por %p132, %p133
      %s135 = sadd.s32 %s26, %s27
      %p136 = scmp.lt.s32.totalorder %s135, 0
      %s137 = scalar_select %p136, %s135, 0
      %s138 = sadd.s32 %s38, %s34
      %p139 = scmp.lt.s32.totalorder %s138, 0
      %s140 = scalar_select %p139, %s138, 0
      %s141 = ssub.s32 %s137, %s140
      %p142 = scmp.eq.s32.totalorder %s141, 0
      %s144 = sadd.s32 %s143, 1
      %s145 = scalar_select %p142, %s143, %s144
      %p148 = pneg %p142
      %p149 = scmp.eq.s32.totalorder %s19, 1
      %p150 = por %p148, %p149
      %p151 = scmp.ne.s32.totalorder %s143, %s146
      %p152 = scmp.eq.s32.totalorder %s19, 0
      %p153 = por %p151, %p152
      %p154 = scmp.ne.s32.totalorder %s143, %s146
      %p155 = scmp.eq.s32.totalorder %s24, 1
      %p156 = por %p154, %p155
      %p157 = scmp.ne.s32.totalorder %s146, %s147
      %p158 = scmp.eq.s32.totalorder %s24, 0
      %p159 = por %p157, %p158
      %p160 = scmp.ne.s32.totalorder %s146, %s147
      %p161 = scmp.eq.s32.totalorder %s25, 1
      %p162 = por %p160, %p161
      %p164 = scmp.ne.s32.totalorder %s147, %s163
      %p165 = scmp.eq.s32.totalorder %s25, 0
      %p166 = por %p164, %p165
      %s167 = sadd.s32 %s26, %s27
      %p168 = scmp.lt.s32.totalorder %s167, 0
      %s169 = scalar_select %p168, %s167, 0
      %s170 = sadd.s32 %s38, %s34
      %p171 = scmp.lt.s32.totalorder %s170, 0
      %s172 = scalar_select %p171, %s170, 0
      %s173 = ssub.s32 %s169, %s172
      %p174 = scmp.eq.s32.totalorder %s173, 0
      %s176 = sadd.s32 %s175, 1
      %s177 = scalar_select %p174, %s175, %s176
      %p180 = pneg %p174
      %p181 = scmp.eq.s32.totalorder %s19, 1
      %p182 = por %p180, %p181
      %p183 = scmp.ne.s32.totalorder %s175, %s178
      %p184 = scmp.eq.s32.totalorder %s19, 0
      %p185 = por %p183, %p184
      %p186 = scmp.ne.s32.totalorder %s175, %s178
      %p187 = scmp.eq.s32.totalorder %s24, 1
      %p188 = por %p186, %p187
      %p189 = scmp.ne.s32.totalorder %s178, %s179
      %p190 = scmp.eq.s32.totalorder %s24, 0
      %p191 = por %p189, %p190
      %p192 = scmp.ne.s32.totalorder %s178, %s179
      %p193 = scmp.eq.s32.totalorder %s25, 1
      %p194 = por %p192, %p193
      %p196 = scmp.ne.s32.totalorder %s179, %s195
      %p197 = scmp.eq.s32.totalorder %s25, 0
      %p198 = por %p196, %p197
      %s199 = ssub.s32 %s26, %s38
      %p200 = scmp.eq.s32.totalorder %s199, 0
      %s202 = sadd.s32 %s201, 1
      %s203 = scalar_select %p200, %s201, %s202
      %p206 = pneg %p200
      %p207 = scmp.eq.s32.totalorder %s19, 1
      %p208 = por %p206, %p207
      %p209 = scmp.ne.s32.totalorder %s201, %s204
      %p210 = scmp.eq.s32.totalorder %s19, 0
      %p211 = por %p209, %p210
      %p212 = scmp.ne.s32.totalorder %s201, %s204
      %p213 = scmp.eq.s32.totalorder %s24, 1
      %p214 = por %p212, %p213
      %p215 = scmp.ne.s32.totalorder %s204, %s205
      %p216 = scmp.eq.s32.totalorder %s24, 0
      %p217 = por %p215, %p216
      %p218 = scmp.ne.s32.totalorder %s204, %s205
      %p219 = scmp.eq.s32.totalorder %s25, 1
      %p220 = por %p218, %p219
      %p222 = scmp.ne.s32.totalorder %s205, %s221
      %p223 = scmp.eq.s32.totalorder %s25, 0
      %p224 = por %p222, %p223
      %s225 = ssub.s32 %s26, %s38
      %p226 = scmp.eq.s32.totalorder %s225, 0
      %s228 = sadd.s32 %s227, 1
      %s229 = scalar_select %p226, %s227, %s228
      %p232 = pneg %p226
      %p233 = scmp.eq.s32.totalorder %s19, 1
      %p234 = por %p232, %p233
      %p235 = scmp.ne.s32.totalorder %s227, %s230
      %p236 = scmp.eq.s32.totalorder %s19, 0
      %p237 = por %p235, %p236
      %p238 = scmp.ne.s32.totalorder %s227, %s230
      %p239 = scmp.eq.s32.totalorder %s24, 1
      %p240 = por %p238, %p239
      %p241 = scmp.ne.s32.totalorder %s230, %s231
      %p242 = scmp.eq.s32.totalorder %s24, 0
      %p243 = por %p241, %p242
      %p244 = scmp.ne.s32.totalorder %s230, %s231
      %p245 = scmp.eq.s32.totalorder %s25, 1
      %p246 = por %p244, %p245
      %p248 = scmp.ne.s32.totalorder %s231, %s247
      %p249 = scmp.eq.s32.totalorder %s25, 0
      %p250 = por %p248, %p249
      %p251 = scmp.le.s32.totalorder 1, %s19
      %p252 = scmp.lt.s32.totalorder %s19, 3
      %p253 = pnand %p251, %p252
      %p254 = pneg %p253
      // Predicated region
      $region9: #{tpu_custom_call.1} parent=5 // pred_check
        _
      $region10: #{tpu_custom_call.1} parent=5 // pred_check_branch
        %256 = sbr.rel (%p253) target = $region12
      $region11: #{tpu_custom_call.1} parent=5 // pred_region
        %s257 = ssub.s32 %s19, 1
      $region12: #{tpu_custom_call.1} parent=5 // pred_fallthru
        _
      %p258 = scmp.lt.s32.totalorder %s19, 2
      // Predicated region
      $region13: #{tpu_custom_call.1} parent=5 // pred_check
        %p259 = pneg %p258
      $region14: #{tpu_custom_call.1} parent=5 // pred_check_branch
        %261 = sbr.rel (%p259) target = $region16
      $region15: #{tpu_custom_call.1} parent=5 // pred_region
        // Predicated region
        $region17: #{tpu_custom_call.1} parent=15 // pred_check
          %p262 = pneg %p57
        $region18: #{tpu_custom_call.1} parent=15 // pred_check_branch
          %264 = sbr.rel (%p262) target = $region20
        $region19: #{tpu_custom_call.1} parent=15 // pred_region
          %s265 = sadd.s32 %s26, %s27
          %p266 = scmp.lt.s32.totalorder %s265, 0
          %s267 = scalar_select %p266, %s265, 0
          %p268 = scmp.lt.s32.totalorder %s267, 0
          %s269 = scalar_select %p268, %s267, 0
          %s270 = smul.addr %s269, 8
          %s271 = scalar_lea.vmem %s0, %s270
          %s272 = sadd.s32 %s26, %s27
          %p273 = scmp.lt.s32.totalorder %s272, 0
          %s274 = scalar_select %p273, %s272, 0
        $region20: #{tpu_custom_call.1} parent=15 // pred_fallthru
          _
        // Predicated region
        $region21: #{tpu_custom_call.1} parent=15 // pred_check
          %p275 = pneg %p89
        $region22: #{tpu_custom_call.1} parent=15 // pred_check_branch
          %277 = sbr.rel (%p275) target = $region24
        $region23: #{tpu_custom_call.1} parent=15 // pred_region
          %s278 = sadd.s32 %s26, %s27
          %p279 = scmp.lt.s32.totalorder %s278, 0
          %s280 = scalar_select %p279, %s278, 0
          %p281 = scmp.lt.s32.totalorder %s280, 0
          %s282 = scalar_select %p281, %s280, 0
          %s283 = smul.addr %s282, 8
          %s284 = scalar_lea.vmem %s1, %s283
          %s285 = sadd.s32 %s26, %s27
          %p286 = scmp.lt.s32.totalorder %s285, 0
          %s287 = scalar_select %p286, %s285, 0
        $region24: #{tpu_custom_call.1} parent=15 // pred_fallthru
          _
        // Predicated region
        $region25: #{tpu_custom_call.1} parent=15 // pred_check
          %p288 = pneg %p121
        $region26: #{tpu_custom_call.1} parent=15 // pred_check_branch
          %290 = sbr.rel (%p288) target = $region28
        $region27: #{tpu_custom_call.1} parent=15 // pred_region
          %s291 = sadd.s32 %s26, %s27
          %p292 = scmp.lt.s32.totalorder %s291, 0
          %s293 = scalar_select %p292, %s291, 0
          %p294 = scmp.lt.s32.totalorder %s293, 0
          %s295 = scalar_select %p294, %s293, 0
          %s296 = smul.addr %s295, 8
          %s297 = scalar_lea.vmem %s2, %s296
          %s298 = sadd.s32 %s26, %s27
          %p299 = scmp.lt.s32.totalorder %s298, 0
          %s300 = scalar_select %p299, %s298, 0
        $region28: #{tpu_custom_call.1} parent=15 // pred_fallthru
          _
        // Predicated region
        $region29: #{tpu_custom_call.1} parent=15 // pred_check
          %p301 = pneg %p153
        $region30: #{tpu_custom_call.1} parent=15 // pred_check_branch
          %303 = sbr.rel (%p301) target = $region32
        $region31: #{tpu_custom_call.1} parent=15 // pred_region
          %s304 = sadd.s32 %s26, %s27
          %p305 = scmp.lt.s32.totalorder %s304, 0
          %s306 = scalar_select %p305, %s304, 0
          %p307 = scmp.lt.s32.totalorder %s306, 0
          %s308 = scalar_select %p307, %s306, 0
          %s309 = smul.addr %s308, 8
          %s310 = scalar_lea.vmem %s3, %s309
          %s311 = sadd.s32 %s26, %s27
          %p312 = scmp.lt.s32.totalorder %s311, 0
          %s313 = scalar_select %p312, %s311, 0
        $region32: #{tpu_custom_call.1} parent=15 // pred_fallthru
          _
        // Predicated region
        $region33: #{tpu_custom_call.1} parent=15 // pred_check
          %p314 = pneg %p185
        $region34: #{tpu_custom_call.1} parent=15 // pred_check_branch
          %316 = sbr.rel (%p314) target = $region36
        $region35: #{tpu_custom_call.1} parent=15 // pred_region
          %s317 = sadd.s32 %s26, %s27
          %p318 = scmp.lt.s32.totalorder %s317, 0
          %s319 = scalar_select %p318, %s317, 0
          %p320 = scmp.lt.s32.totalorder %s319, 0
          %s321 = scalar_select %p320, %s319, 0
          %s322 = smul.addr %s321, 8
          %s323 = scalar_lea.vmem %s4, %s322
          %s324 = sadd.s32 %s26, %s27
          %p325 = scmp.lt.s32.totalorder %s324, 0
          %s326 = scalar_select %p325, %s324, 0
        $region36: #{tpu_custom_call.1} parent=15 // pred_fallthru
          _
      $region16: #{tpu_custom_call.1} parent=5 // pred_fallthru
        _
      %p327 = scmp.le.s32.totalorder 1, %s19
      %p328 = scmp.lt.s32.totalorder %s19, 3
      %p329 = pnand %p327, %p328
      %p330 = pneg %p329
      // Predicated region
      $region37: #{tpu_custom_call.1} parent=5 // pred_check
        _
      $region38: #{tpu_custom_call.1} parent=5 // pred_check_branch
        %332 = sbr.rel (%p329) target = $region40
      $region39: #{tpu_custom_call.1} parent=5 // pred_region
        %s333 = ssub.s32 %s19, 1
        %s334 = sadd.s32 %s28, %s29
        %p335 = scmp.lt.s32.totalorder %s334, 0
        %s336 = scalar_select %p335, %s334, 0
        %p337 = scmp.lt.s32.totalorder %s336, 0
        %s338 = scalar_select %p337, %s336, 0
        %s339 = smul.addr %s338, 8
        %s340 = scalar_lea.vmem %s0, %s339
        %p341 = pneg %p63
        %p342 = pneg %p60
        %s343 = sadd.s32 %s28, %s29
        %p344 = scmp.lt.s32.totalorder %s343, 0
        %s345 = scalar_select %p344, %s343, 0
        %p346 = scmp.lt.s32.totalorder %s345, 0
        %s347 = scalar_select %p346, %s345, 0
        %s348 = smul.addr %s347, 8
        %s349 = scalar_lea.vmem %s1, %s348
        %p350 = pneg %p95
        %p351 = pneg %p92
        %s352 = sadd.s32 %s28, %s29
        %p353 = scmp.lt.s32.totalorder %s352, 0
        %s354 = scalar_select %p353, %s352, 0
        %p355 = scmp.lt.s32.totalorder %s354, 0
        %s356 = scalar_select %p355, %s354, 0
        %s357 = smul.addr %s356, 8
        %s358 = scalar_lea.vmem %s2, %s357
        %p359 = pneg %p127
        %p360 = pneg %p124
        %s361 = sadd.s32 %s28, %s29
        %p362 = scmp.lt.s32.totalorder %s361, 0
        %s363 = scalar_select %p362, %s361, 0
        %p364 = scmp.lt.s32.totalorder %s363, 0
        %s365 = scalar_select %p364, %s363, 0
        %s366 = smul.addr %s365, 8
        %s367 = scalar_lea.vmem %s3, %s366
        %p368 = pneg %p159
        %p369 = pneg %p156
        %s370 = sadd.s32 %s28, %s29
        %p371 = scmp.lt.s32.totalorder %s370, 0
        %s372 = scalar_select %p371, %s370, 0
        %p373 = scmp.lt.s32.totalorder %s372, 0
        %s374 = scalar_select %p373, %s372, 0
        %s375 = smul.addr %s374, 8
        %s376 = scalar_lea.vmem %s4, %s375
        %p377 = pneg %p191
        %p378 = pneg %p188
        %p379 = pneg %p217
        %p380 = pneg %p214
        %s381 = sand.u32 %s204, 1
        %s382 = scalar_lea.sflag [#allocation3], %s381
        %s383 = sand.u32 %s204, 1
        %s384 = scalar_lea.vmem [#allocation2], %s383
        %p385 = pneg %p243
        %p386 = pneg %p240
        %s387 = sand.u32 %s230, 1
        %s388 = scalar_lea.sflag [#allocation5], %s387
        %s389 = sand.u32 %s230, 1
        %s390 = scalar_lea.vmem [#allocation4], %s389
        %s391 = sadd.s32 %s28, %s29
        %p392 = scmp.lt.s32.totalorder %s391, 0
        %s393 = scalar_select %p392, %s391, 0
        %p394 = scmp.lt.s32.totalorder %s393, 0
        %s395 = scalar_select %p394, %s393, 0
        %s396 = smul.addr %s395, 8
        %s397 = scalar_lea.vmem %s0, %s396
        %s398 = sadd.s32 %s28, %s29
        %p399 = scmp.lt.s32.totalorder %s398, 0
        %s400 = scalar_select %p399, %s398, 0
        %s401 = sadd.s32 %s28, %s29
        %p402 = scmp.lt.s32.totalorder %s401, 0
        %s403 = scalar_select %p402, %s401, 0
        %p404 = scmp.lt.s32.totalorder %s403, 0
        %s405 = scalar_select %p404, %s403, 0
        %s406 = smul.addr %s405, 8
        %s407 = scalar_lea.vmem %s1, %s406
        %s408 = sadd.s32 %s28, %s29
        %p409 = scmp.lt.s32.totalorder %s408, 0
        %s410 = scalar_select %p409, %s408, 0
        %s411 = sadd.s32 %s28, %s29
        %p412 = scmp.lt.s32.totalorder %s411, 0
        %s413 = scalar_select %p412, %s411, 0
        %p414 = scmp.lt.s32.totalorder %s413, 0
        %s415 = scalar_select %p414, %s413, 0
        %s416 = smul.addr %s415, 8
        %s417 = scalar_lea.vmem %s2, %s416
        %s418 = sadd.s32 %s28, %s29
        %p419 = scmp.lt.s32.totalorder %s418, 0
        %s420 = scalar_select %p419, %s418, 0
        %s421 = sadd.s32 %s28, %s29
        %p422 = scmp.lt.s32.totalorder %s421, 0
        %s423 = scalar_select %p422, %s421, 0
        %p424 = scmp.lt.s32.totalorder %s423, 0
        %s425 = scalar_select %p424, %s423, 0
        %s426 = smul.addr %s425, 8
        %s427 = scalar_lea.vmem %s3, %s426
        %s428 = sadd.s32 %s28, %s29
        %p429 = scmp.lt.s32.totalorder %s428, 0
        %s430 = scalar_select %p429, %s428, 0
        %s431 = sadd.s32 %s28, %s29
        %p432 = scmp.lt.s32.totalorder %s431, 0
        %s433 = scalar_select %p432, %s431, 0
        %p434 = scmp.lt.s32.totalorder %s433, 0
        %s435 = scalar_select %p434, %s433, 0
        %s436 = smul.addr %s435, 8
        %s437 = scalar_lea.vmem %s4, %s436
        %s438 = sadd.s32 %s28, %s29
        %p439 = scmp.lt.s32.totalorder %s438, 0
        %s440 = scalar_select %p439, %s438, 0
        %p441 = scmp.eq.s32.totalorder %s29, 0
        // Predicated region
        $region41: #{tpu_custom_call.1} parent=39 // pred_check
          %p442 = pneg %p441
        $region42: #{tpu_custom_call.1} parent=39 // pred_check_branch
          %444 = sbr.rel (%p442) target = $region44
        $region43: #{tpu_custom_call.1} parent=39 // pred_region
          %445 = vst [vmem:[%s384] sm:$0x1] 0.0
          %446 = vst [vmem:[%s390] sm:$0x1] 0.0
        $region44: #{tpu_custom_call.1} parent=39 // pred_fallthru
          _
        %v447 = vld [vmem:[%s397] sm:$0xff]
        %v448 = vld [vmem:[%s407] sm:$0xff]
        %v449 = vld [vmem:[%s417] sm:$0xff]
        %v450 = vld [vmem:[%s427] sm:$0xff]
        %v451 = vld [vmem:[%s437] sm:$0xff]
        %s452 = sadd.s32 %s28, %s29
        %s453 = smul.u32 %s452, 8
        %v454 = vlaneseq
        %v455 = vshrl.u32 %v454, 7
        %v456 = vstv %s453
        %v457 = vadd.s32 %v456, %v455
        %vm458 = vcmp.lt.s32.totalorder %v457, 8
        %vm459 = vcmask 261120
        %v460 = vsel %vm459, %v447, -inf
        %461 = vmax.xlane.f32.xlu0 %v460
        %v462 = vpop.xlane.xlu0 %461
        %v463 = vsub.f32 %v447, %v462
        %v464 = vmul.f32 %v463, 1.442695
        %v465 = vpow.pop %v464
        %v466 = vsel %vm459, %v465, 0.0
        %467 = vadd.xlane.f32.xlu0 %v466
        %v468 = vpop.xlane.xlu0 %467
        %v469 = vlog2.pop %v468
        %v470 = vmul.f32 %v469, 0.6931472
        %v471 = vlaneseq
        %v472 = vand.u32 %v471, 127
        %473 = vset.pattern.permute.xlu0 0
        %474 = vperm.xlu0 %473, %v448
        %v475 = vpop.permute.xlu0 %474
        %vm476 = vcmp.eq.s32.totalorder %v472, %v475
        %v477 = vsel %vm476, 0.903125, 0.003125
        %v478 = vadd.f32 %v462, %v470
        %v479 = vmul.f32 %v447, %v477
        %v480 = vsel %vm459, %v479, 0.0
        %481 = vadd.xlane.f32.xlu0 %v480
        %v482 = vpop.xlane.xlu0 %481
        %v483 = vsub.f32 %v478, %v482
        %v484 = vmul.f32 %v449, %v450
        %vm485 = vcmask 31744
        %v486 = vsel %vm485, %v484, 0.0
        %487 = vadd.xlane.f32.xlu0 %v486
        %v488 = vpop.xlane.xlu0 %487
        %v489 = vsub.f32 %v451, %v488
        %v490 = vsel %vm458, %v483, 0.0
        %vm491 = vcmask 7168
        %v492 = vsel %vm491, %v490, 0.0
        %493 = vadd.xlane.f32.xlu0 %v492
        %v494 = vpop.xlane.xlu0 %493
        %v495 = vrot.slane %v494, 4
        %v496 = vadd.f32 %v494, %v495
        %v497 = vrot.slane %v496, 2
        %v498 = vadd.f32 %v496, %v497
        %v499 = vrot.slane %v498, 1
        %v500 = vadd.f32 %v498, %v499
        %s501 = vtos %v500
        %s502 = smul.f32 %s501, 0.125
        %v503 = vsel %vm458, %v489, 0.0
        %v504 = vsel %vm491, %v503, 0.0
        %505 = vadd.xlane.f32.xlu0 %v504
        %v506 = vpop.xlane.xlu0 %505
        %v507 = vrot.slane %v506, 4
        %v508 = vadd.f32 %v506, %v507
        %v509 = vrot.slane %v508, 2
        %v510 = vadd.f32 %v508, %v509
        %v511 = vrot.slane %v510, 1
        %v512 = vadd.f32 %v510, %v511
        %s513 = vtos %v512
        %s514 = smul.f32 %s513, 0.125
        %v515 = vld [vmem:[%s384] sm:$0x1]
        %v516 = vstv %s502
        %v517 = vadd.f32 %v515, %v516
        %518 = vst [vmem:[%s384] sm:$0x1] %v517
        %v519 = vld [vmem:[%s390] sm:$0x1]
        %v520 = vstv %s514
        %v521 = vadd.f32 %v519, %v520
        %522 = vst [vmem:[%s390] sm:$0x1] %v521
        %s523 = sand.u32 %s204, 1
        %s524 = scalar_lea.sflag [#allocation3], %s523
        %s525 = sand.u32 %s204, 1
        %s526 = scalar_lea.vmem [#allocation2], %s525
        %s527 = sand.u32 %s230, 1
        %s528 = scalar_lea.sflag [#allocation5], %s527
        %s529 = sand.u32 %s230, 1
        %s530 = scalar_lea.vmem [#allocation4], %s529
        // Predicated region
        $region45: #{tpu_custom_call.1} parent=39 // pred_check
          %p531 = pneg %p214
        $region46: #{tpu_custom_call.1} parent=39 // pred_check_branch
          %533 = sbr.rel (%p531) target = $region48
        $region47: #{tpu_custom_call.1} parent=39 // pred_region
          %535 = vsyncadd %s524, 0
          %s536 = scalar_lea.hbm %s5, %s28
          %s538 = sshll.u32 %s526, 4
          %s539 = int_to_ptr.vmem [resolvable:$true] %s538
          %s540 = sshll.u32 %s536, 4
          %s541 = int_to_ptr.hbm [resolvable:$true] %s540
          %543 = dma.vmem_to_hbm [thread:$0]  %s539, 16, %s541, %s524
        $region48: #{tpu_custom_call.1} parent=39 // pred_fallthru
          _
        // Predicated region
        $region49: #{tpu_custom_call.1} parent=39 // pred_check
          %p544 = pneg %p240
        $region50: #{tpu_custom_call.1} parent=39 // pred_check_branch
          %546 = sbr.rel (%p544) target = $region52
        $region51: #{tpu_custom_call.1} parent=39 // pred_region
          %548 = vsyncadd %s528, 0
          %s549 = scalar_lea.hbm %s6, %s28
          %s551 = sshll.u32 %s530, 4
          %s552 = int_to_ptr.vmem [resolvable:$true] %s551
          %s553 = sshll.u32 %s549, 4
          %s554 = int_to_ptr.hbm [resolvable:$true] %s553
          %556 = dma.vmem_to_hbm [thread:$0]  %s552, 16, %s554, %s528
        $region52: #{tpu_custom_call.1} parent=39 // pred_fallthru
          _
      $region40: #{tpu_custom_call.1} parent=5 // pred_fallthru
        _
      %p557 = scmp.le.s32.totalorder 2, %s19
      // Predicated region
      $region53: #{tpu_custom_call.1} parent=5 // pred_check
        %p558 = pneg %p557
      $region54: #{tpu_custom_call.1} parent=5 // pred_check_branch
        %560 = sbr.rel (%p558) target = $region56
      $region55: #{tpu_custom_call.1} parent=5 // pred_region
        %s561 = ssub.s32 %s19, 2
        // Predicated region
        $region57: #{tpu_custom_call.1} parent=55 // pred_check
          %p562 = pneg %p220
        $region58: #{tpu_custom_call.1} parent=55 // pred_check_branch
          %564 = sbr.rel (%p562) target = $region60
        $region59: #{tpu_custom_call.1} parent=55 // pred_region
          %s565 = sand.u32 %s205, 1
          %s566 = scalar_lea.sflag [#allocation3], %s565
          %s567 = sand.u32 %s205, 1
          %s568 = scalar_lea.vmem [#allocation2], %s567
          %570 = dma.done %s566, 16
        $region60: #{tpu_custom_call.1} parent=55 // pred_fallthru
          _
        // Predicated region
        $region61: #{tpu_custom_call.1} parent=55 // pred_check
          %p571 = pneg %p246
        $region62: #{tpu_custom_call.1} parent=55 // pred_check_branch
          %573 = sbr.rel (%p571) target = $region64
        $region63: #{tpu_custom_call.1} parent=55 // pred_region
          %s574 = sand.u32 %s231, 1
          %s575 = scalar_lea.sflag [#allocation5], %s574
          %s576 = sand.u32 %s231, 1
          %s577 = scalar_lea.vmem [#allocation4], %s576
          %579 = dma.done %s575, 16
        $region64: #{tpu_custom_call.1} parent=55 // pred_fallthru
          _
      $region56: #{tpu_custom_call.1} parent=5 // pred_fallthru
        _
    $region6: #{tpu_custom_call.1} parent=1 // loop_footer
      %s23 = sadd.s32 1, %s19
    $region7: #{tpu_custom_call.1} parent=1 // loop_footer_branch
      %18 = sbr.rel target = $region3
    $region8: #{tpu_custom_call.1} parent=1 // loop_exit
      _
    %580 = vsyncpa [#allocation3], 1
    %s581 = scalar_lea.sflag [#allocation3], 1
    %582 = vsyncpa %s581, 1
    %583 = vsyncpa [#allocation5], 1
    %s584 = scalar_lea.sflag [#allocation5], 1
    %585 = vsyncpa %s584, 1

</llo_original>
